<compile_context>
chip_gen: v6e
topology: v6e:2x2x1
jax: 0.10.0
libtpu: 0.0.40
codegen_flags: <defaults>
</compile_context>

<pallas_src>
import functools

import jax
import jax.numpy as jnp
from jax import lax
from jax.experimental import pallas as pl
from jax.experimental.pallas import tpu as pltpu

MAX_ITER = 5     # module default
_EPS = 1e-30     # guards zero-norm rows / zero row-sums (incl. padding rows)


def _round_up(a, b):
    return (a + b - 1) // b * b


def _vmem_limit(needed_bytes):
    # Default scoped VMEM is 16 MiB (v5e) / 32 MiB (v6e, v7x). Never request
    # less than that; stay comfortably under v7x's 64 MiB physical VMEM.
    return int(min(max(2 * needed_bytes, 32 * 1024 * 1024), 48 * 1024 * 1024))


def _center_and_scale(x, fast):
    """(x - row_mean(x)) * 1/||x - row_mean(x)||  (norm folded into operand)."""
    x = x.astype(jnp.float32)
    x = x - jnp.mean(x, axis=1, keepdims=True)
    ss = jnp.maximum(jnp.sum(x * x, axis=1, keepdims=True), _EPS)
    inv = lax.rsqrt(ss) if fast else 1.0 / jnp.sqrt(ss)
    return x * inv


def _w_kernel(xr_ref, xc_ref, w_ref, *, fast):
    """W tile = relu(xs[i] @ xs[j].T) with normalisation pre-folded into xs."""
    xr = _center_and_scale(xr_ref[...], fast)
    xc = _center_and_scale(xc_ref[...], fast)
    if fast:  # bf16 MXU operands, f32 accumulation
        xr = xr.astype(jnp.bfloat16)
        xc = xc.astype(jnp.bfloat16)
    # Contract the feature dims directly — no x.T materialisation / XLU pass.
    w = lax.dot_general(xr, xc, dimension_numbers=(((1,), (1,)), ((), ())),
                        preferred_element_type=jnp.float32)
    w_ref[...] = jnp.maximum(w, 0.0)          # set_negative='hard' -> relu


def _replicator_kernel(ps0_ref, w_ref, out_ref, buf_ref, *, n_pad, tm, fast):
    """One (iteration, row-tile) grid step of replicator dynamics.

    buf_ref is a (2*n_pad, m_pad) ping-pong state buffer: rows [slot*n_pad,
    slot*n_pad + n_pad) hold the full ps of one iteration. Reading the whole
    old slot and writing the new slot gives the synchronous (Jacobi) update
    the reference uses.
    """
    it = pl.program_id(0)        # replicator iteration (sequential)
    i = pl.program_id(1)         # row tile

    # Seed the ping-pong state with ps0 once, before the first row tile.
    @pl.when(jnp.logical_and(it == 0, i == 0))
    def _():
        buf_ref[pl.ds(0, n_pad), :] = ps0_ref[...]

    old_base = lax.rem(it, 2) * n_pad
    new_base = lax.rem(it + 1, 2) * n_pad
    row0 = i * tm

    p_all = buf_ref[pl.ds(pl.multiple_of(old_base, 8), n_pad), :]        # (n_pad, m_pad)
    p_tile = buf_ref[pl.ds(pl.multiple_of(old_base + row0, 8), tm), :]   # (tm, m_pad)
    w_tile = w_ref[...]                                                  # (tm, n_pad)

    if fast:
        q = jnp.dot(w_tile.astype(jnp.bfloat16), p_all.astype(jnp.bfloat16),
                    preferred_element_type=jnp.float32)
    else:
        q = jnp.dot(w_tile, p_all, preferred_element_type=jnp.float32)

    p_new = p_tile * q
    s = jnp.maximum(jnp.sum(p_new, axis=1, keepdims=True), _EPS)
    if fast:
        p_new = p_new * pl.reciprocal(s, approx=True)    # EUP slot, ~free
    else:
        p_new = p_new / s

    buf_ref[pl.ds(pl.multiple_of(new_base + row0, 8), tm), :] = p_new
    out_ref[...] = p_new          # written every step; last iteration wins


def gtg_forward(fc7, probs, labs, L, U, *, max_iter=MAX_ITER, fast=False):
    """Returns (ps, W) exactly like GTG.forward with a prior `probs`.

    fast=True: bf16 MXU operands + approximate (EUP) reciprocals (looser
    numerics, ~2x MXU rate on v5e/v6e/v7x). Default is full f32 fidelity.
    """
    n, d = fc7.shape
    m = probs.shape[1]

    # Glue: `_init_probs_prior` (scatter init) stays in plain JAX.
    ps0 = jnp.zeros((n, m), jnp.float32)
    ps0 = ps0.at[U, :].set(probs[U, :].astype(jnp.float32))
    ps0 = ps0.at[L, labs].set(1.0)

    # Padding: classes -> 128 lanes (unmasked vst, dense MXU passes),
    # samples -> multiple of the row tile. Exact: padded W rows/cols are 0 and
    # padded ps rows stay 0 through the dynamics.
    tm = min(256, _round_up(n, 8))      # 256-wide tiles at scale, full array when tiny
    n_pad = _round_up(n, tm)
    m_pad = _round_up(m, 128)
    n_tiles = n_pad // tm

    fc7_p = jnp.zeros((n_pad, d), fc7.dtype).at[:n, :].set(fc7)
    ps0_p = jnp.zeros((n_pad, m_pad), jnp.float32).at[:n, :m].set(ps0)

    # ---- phase 1: W = relu(correlation(fc7)), tiled over (row, col) tiles ---
    w_need = 2 * (2 * tm * d * 4) + 2 * tm * tm * 4
    W_p = pl.pallas_call(
        functools.partial(_w_kernel, fast=fast),
        out_shape=jax.ShapeDtypeStruct((n_pad, n_pad), jnp.float32),
        grid_spec=pltpu.PrefetchScalarGridSpec(
            num_scalar_prefetch=0,
            grid=(n_tiles, n_tiles),
            in_specs=[pl.BlockSpec((tm, d), lambda i, j: (i, 0)),
                      pl.BlockSpec((tm, d), lambda i, j: (j, 0))],
            out_specs=pl.BlockSpec((tm, tm), lambda i, j: (i, j)),
        ),
        compiler_params=pltpu.CompilerParams(
            dimension_semantics=("parallel", "parallel"),   # both TCs on v7x
            vmem_limit_bytes=_vmem_limit(w_need)),
    )(fc7_p, fc7_p)

    # ---- phase 2: replicator dynamics (tol=-1 -> fixed max_iter steps) ------
    # W row tiles stream from HBM (double-buffered by BlockSpec) while the full
    # ps state ping-pongs in VMEM scratch. Grid axes are sequential because the
    # scratch carries state across iterations.
    rep_need = (2 * tm * n_pad * 4          # W row tile, double-buffered
                + 2 * n_pad * m_pad * 4     # ps0 (resident)
                + 2 * tm * m_pad * 4        # output tile
                + 2 * n_pad * m_pad * 4)    # ping-pong scratch
    ps_p = pl.pallas_call(
        functools.partial(_replicator_kernel, n_pad=n_pad, tm=tm, fast=fast),
        out_shape=jax.ShapeDtypeStruct((n_pad, m_pad), jnp.float32),
        grid_spec=pltpu.PrefetchScalarGridSpec(
            num_scalar_prefetch=0,
            grid=(max_iter, n_tiles),
            in_specs=[pl.BlockSpec((n_pad, m_pad), lambda it, i: (0, 0)),
                      pl.BlockSpec((tm, n_pad), lambda it, i: (i, 0))],
            out_specs=pl.BlockSpec((tm, m_pad), lambda it, i: (i, 0)),
            scratch_shapes=[pltpu.VMEM((2 * n_pad, m_pad), jnp.float32)],
        ),
        compiler_params=pltpu.CompilerParams(
            dimension_semantics=("arbitrary", "arbitrary"),
            vmem_limit_bytes=_vmem_limit(rep_need)),
    )(ps0_p, W_p)

    return ps_p[:n, :m], W_p[:n, :n]


def gtg_reference(fc7, probs, labs, L, U, max_iter=MAX_ITER):
    """Pure-JAX reference for a correctness sanity check."""
    n, _ = fc7.shape
    m = probs.shape[1]
    x = fc7 - jnp.mean(fc7, axis=1, keepdims=True)
    norms = jnp.linalg.norm(x, axis=1, keepdims=True)
    W = jnp.maximum((x @ x.T) / (norms * norms.T), 0.0)
    ps = jnp.zeros((n, m), jnp.float32)
    ps = ps.at[U, :].set(probs[U, :])
    ps = ps.at[L, labs].set(1.0)
    for _ in range(max_iter):
        ps = ps * (W @ ps)
        ps = ps / jnp.sum(ps, axis=1, keepdims=True)
    return ps, W


if __name__ == "__main__":
    key = jax.random.PRNGKey(0)
    n, d, m = 8, 32, 4  # samples, feature dim (fc7), total_classes

    k1, k2, k3 = jax.random.split(key, 3)
    fc7 = jax.random.normal(k1, (n, d), dtype=jnp.float32)
    probs = jax.nn.softmax(jax.random.normal(k2, (n, m), dtype=jnp.float32), axis=-1)

    L = jnp.arange(0, n // 2, dtype=jnp.int32)       # labeled indices
    U = jnp.arange(n // 2, n, dtype=jnp.int32)       # unlabeled indices
    labs = jax.random.randint(k3, (n // 2,), 0, m, dtype=jnp.int32)

    ps_ref, W_ref = gtg_reference(fc7, probs, labs, L, U)

    # Precise path (full f32): tight check against the reference.
    ps, W = gtg_forward(fc7, probs, labs, L, U)
    jax.block_until_ready((ps, W))
    assert jnp.allclose(W, W_ref, atol=1e-5, rtol=1e-4), "W mismatch (precise)"
    assert jnp.allclose(ps, ps_ref, atol=1e-5, rtol=1e-4), "ps mismatch (precise)"

    # Fast path (bf16 MXU + approx reciprocal): looser tolerance by design.
    ps_f, W_f = gtg_forward(fc7, probs, labs, L, U, fast=True)
    jax.block_until_ready((ps_f, W_f))
    assert jnp.allclose(W_f, W_ref, atol=3e-2), "W mismatch (fast)"
    assert jnp.allclose(ps_f, ps_ref, atol=1e-1), "ps mismatch (fast)"

    print("KERNEL_OK")
</pallas_src>

<mosaic_0001>
module attributes {stable_mosaic.version = 11 : i64} {
  func.func @_w_kernel(%arg0: i32, %arg1: i32, %arg2: memref<8x32xf32, #tpu.memory_space<vmem>>, %arg3: memref<8x32xf32, #tpu.memory_space<vmem>>, %arg4: memref<8x8xf32, #tpu.memory_space<vmem>>) attributes {dimension_semantics = [#tpu.dimension_semantics<parallel>, #tpu.dimension_semantics<parallel>], iteration_bounds = array<i64: 1, 1>, scalar_prefetch = 0 : i64, scratch_operands = 0 : i64, tpu.core_type = #tpu.core_type<tc>, window_params = [{transform_indices = @transform_0, window_bounds = array<i64: 8, 32>}, {transform_indices = @transform_1, window_bounds = array<i64: 8, 32>}, {transform_indices = @transform_2, window_bounds = array<i64: 8, 8>}]} {
    %c0 = arith.constant 0 : index
    %c0_0 = arith.constant 0 : index
    %0 = vector.load %arg2[%c0, %c0_0] : memref<8x32xf32, #tpu.memory_space<vmem>>, vector<8x32xf32>
    %cst = arith.constant dense<0.000000e+00> : vector<8xf32>
    %1 = vector.multi_reduction <add>, %0, %cst [1] : vector<8x32xf32> to vector<8xf32>
    %2 = vector.shape_cast %1 : vector<8xf32> to vector<8x1xf32>
    %cst_1 = arith.constant 3.200000e+01 : f32
    %3 = vector.broadcast %cst_1 : f32 to vector<8x1xf32>
    %4 = arith.divf %2, %3 : vector<8x1xf32>
    %5 = vector.broadcast %4 : vector<8x1xf32> to vector<8x32xf32>
    %6 = arith.subf %0, %5 : vector<8x32xf32>
    %7 = arith.mulf %6, %6 : vector<8x32xf32>
    %cst_2 = arith.constant dense<0.000000e+00> : vector<8xf32>
    %8 = vector.multi_reduction <add>, %7, %cst_2 [1] : vector<8x32xf32> to vector<8xf32>
    %9 = vector.shape_cast %8 : vector<8xf32> to vector<8x1xf32>
    %cst_3 = arith.constant 1.000000e-30 : f32
    %10 = vector.broadcast %cst_3 : f32 to vector<8x1xf32>
    %11 = arith.maximumf %9, %10 : vector<8x1xf32>
    %12 = math.sqrt %11 : vector<8x1xf32>
    %cst_4 = arith.constant 1.000000e+00 : f32
    %13 = vector.broadcast %cst_4 : f32 to vector<8x1xf32>
    %14 = arith.divf %13, %12 : vector<8x1xf32>
    %15 = vector.broadcast %14 : vector<8x1xf32> to vector<8x32xf32>
    %16 = arith.mulf %6, %15 : vector<8x32xf32>
    %c0_5 = arith.constant 0 : index
    %c0_6 = arith.constant 0 : index
    %17 = vector.load %arg3[%c0_5, %c0_6] : memref<8x32xf32, #tpu.memory_space<vmem>>, vector<8x32xf32>
    %cst_7 = arith.constant dense<0.000000e+00> : vector<8xf32>
    %18 = vector.multi_reduction <add>, %17, %cst_7 [1] : vector<8x32xf32> to vector<8xf32>
    %19 = vector.shape_cast %18 : vector<8xf32> to vector<8x1xf32>
    %cst_8 = arith.constant 3.200000e+01 : f32
    %20 = vector.broadcast %cst_8 : f32 to vector<8x1xf32>
    %21 = arith.divf %19, %20 : vector<8x1xf32>
    %22 = vector.broadcast %21 : vector<8x1xf32> to vector<8x32xf32>
    %23 = arith.subf %17, %22 : vector<8x32xf32>
    %24 = arith.mulf %23, %23 : vector<8x32xf32>
    %cst_9 = arith.constant dense<0.000000e+00> : vector<8xf32>
    %25 = vector.multi_reduction <add>, %24, %cst_9 [1] : vector<8x32xf32> to vector<8xf32>
    %26 = vector.shape_cast %25 : vector<8xf32> to vector<8x1xf32>
    %cst_10 = arith.constant 1.000000e-30 : f32
    %27 = vector.broadcast %cst_10 : f32 to vector<8x1xf32>
    %28 = arith.maximumf %26, %27 : vector<8x1xf32>
    %29 = math.sqrt %28 : vector<8x1xf32>
    %cst_11 = arith.constant 1.000000e+00 : f32
    %30 = vector.broadcast %cst_11 : f32 to vector<8x1xf32>
    %31 = arith.divf %30, %29 : vector<8x1xf32>
    %32 = vector.broadcast %31 : vector<8x1xf32> to vector<8x32xf32>
    %33 = arith.mulf %23, %32 : vector<8x32xf32>
    %cst_12 = arith.constant dense<0.000000e+00> : vector<8x8xf32>
    %34 = tpu.matmul %16, %33, %cst_12 {dimension_numbers = #tpu.dot_dimension_numbers<[1], [1], [0], [0], [0, 0, 1, 0], [], []>} : vector<8x32xf32>, vector<8x32xf32>, vector<8x8xf32> -> vector<8x8xf32>
    %cst_13 = arith.constant 0.000000e+00 : f32
    %35 = vector.broadcast %cst_13 : f32 to vector<8x8xf32>
    %36 = arith.maximumf %34, %35 : vector<8x8xf32>
    %c0_14 = arith.constant 0 : index
    %c0_15 = arith.constant 0 : index
    %37 = vector.load %arg4[%c0_14, %c0_15] : memref<8x8xf32, #tpu.memory_space<vmem>>, vector<8x8xf32>
    tpu.vector_store %arg4[%c0_14, %c0_15], %36 {strides = array<i32>} : memref<8x8xf32, #tpu.memory_space<vmem>>, vector<8x8xf32>,
    return
  }
  func.func @transform_0(%arg0: i32, %arg1: i32) -> (i32, i32) {
    %c0_i32 = arith.constant 0 : i32
    %c0_i32_0 = arith.constant 0 : i32
    return %arg0, %c0_i32 : i32, i32
  }
  func.func @transform_1(%arg0: i32, %arg1: i32) -> (i32, i32) {
    %c0_i32 = arith.constant 0 : i32
    %c0_i32_0 = arith.constant 0 : i32
    return %arg1, %c0_i32 : i32, i32
  }
  func.func @transform_2(%arg0: i32, %arg1: i32) -> (i32, i32) {
    %c0_i32 = arith.constant 0 : i32
    return %arg0, %arg1 : i32, i32
  }
}

</mosaic_0001>

<llo_original>
// kernel: tpu_custom_call.1
$region0: #{tpu_custom_call.1}
  #allocation0 [shape = 'u32[]', space=smem, size = 0x4, offset = 0x4, fixed_abs, tag = 'smem constant byte address 0x4 - core index']
  #allocation1 [shape = 'u32[144,128]{1,0:T(1,128)}', space=vmem, size = 0x12000, scoped, tag = 'internal scratch']
  %s0 = inlined_call_operand.hbm [shape: f32[8,32], index: 0, kind: input, shape index: {}]
  %s1 = inlined_call_operand.hbm [shape: f32[8,32], index: 1, kind: input, shape index: {}]
  %s2 = inlined_call_operand.hbm [shape: f32[8,8], index: 2, kind: output, shape index: {}]
  %s3 = sld [smem:[#allocation0]]
  $region26: #{tpu_custom_call.1} parent=0
    _
  %s5 = ssub.s32 1, %s3
  %s6 = scalar_select 0, %s5, %s3
  $region1: #{tpu_custom_call.1} parent=0
    #allocation2 [shape = 'u8[4096]{0}', space=vmem, size = 0x1000, scoped, tag = 'input window, operand 0, single buffered']
    #allocation3 [shape = 's32[1]{0}', space=sflag, size = 0x4, scoped, tag = 'scoped memory for tpu_custom_call.1']
    #allocation4 [shape = 's32[1]{0}', space=sflag, size = 0x4, scoped, tag = 'scoped memory for tpu_custom_call.1']
    #allocation5 [shape = 'u8[4096]{0}', space=vmem, size = 0x1000, scoped, tag = 'input window, operand 1, single buffered']
    #allocation6 [shape = 's32[1]{0}', space=sflag, size = 0x4, scoped, tag = 'scoped memory for tpu_custom_call.1']
    #allocation7 [shape = 'u8[4096]{0}', space=vmem, size = 0x1000, scoped, tag = 'output window, operand 0, single buffered']
    %7 = vsyncpa [#allocation3], 0
    %8 = vsyncpa [#allocation6], 0
    %9 = vsyncpa [#allocation4], 0
    // Predicated region
    $region2: #{tpu_custom_call.1} parent=1 // pred_check
      _
    $region3: #{tpu_custom_call.1} parent=1 // pred_check_branch
      %11 = sbr.rel (0) target = $region5
    $region4: #{tpu_custom_call.1} parent=1 // pred_region
      %s13 = ssub.s32 128, 128
      %14 = vsyncadd [#allocation3], %s13
      %s16 = sshll.u32 [#allocation2], 4
      %s17 = int_to_ptr.vmem [resolvable:$true] %s16
      %19 = dma.hbm_to_vmem [thread:$0]  %s0, 128, %s17, [#allocation3]
    $region5: #{tpu_custom_call.1} parent=1 // pred_fallthru
      _
    // Predicated region
    $region6: #{tpu_custom_call.1} parent=1 // pred_check
      _
    $region7: #{tpu_custom_call.1} parent=1 // pred_check_branch
      %21 = sbr.rel (0) target = $region9
    $region8: #{tpu_custom_call.1} parent=1 // pred_region
      %s23 = ssub.s32 128, 128
      %24 = vsyncadd [#allocation6], %s23
      %s26 = sshll.u32 [#allocation5], 4
      %s27 = int_to_ptr.vmem [resolvable:$true] %s26
      %29 = dma.hbm_to_vmem [thread:$0]  %s1, 128, %s27, [#allocation6]
    $region9: #{tpu_custom_call.1} parent=1 // pred_fallthru
      _
    // Predicated region
    $region10: #{tpu_custom_call.1} parent=1 // pred_check
      _
    $region11: #{tpu_custom_call.1} parent=1 // pred_check_branch
      %31 = sbr.rel (0) target = $region13
    $region12: #{tpu_custom_call.1} parent=1 // pred_region
      %32 = dma.done [#allocation3], 128
    $region13: #{tpu_custom_call.1} parent=1 // pred_fallthru
      _
    // Predicated region
    $region14: #{tpu_custom_call.1} parent=1 // pred_check
      _
    $region15: #{tpu_custom_call.1} parent=1 // pred_check_branch
      %34 = sbr.rel (0) target = $region17
    $region16: #{tpu_custom_call.1} parent=1 // pred_region
      %35 = dma.done [#allocation6], 128
    $region17: #{tpu_custom_call.1} parent=1 // pred_fallthru
      _
    %v36 = vld [vmem:[#allocation2] sm:$0xff]
    %vm37 = vcmask 261120
    %v38 = vsel %vm37, %v36, 0.0
    %39 = vadd.xlane.f32.xlu0 %v38
    %v40 = vpop.xlane.xlu0 %39
    %v41 = vrcp.pop 32.0
    %v42 = vmul.f32 %v40, %v41
    %v43 = vsub.f32 %v36, %v42
    %v44 = vmul.f32 %v43, %v43
    %v45 = vsel %vm37, %v44, 0.0
    %46 = vadd.xlane.f32.xlu0 %v45
    %v47 = vpop.xlane.xlu0 %46
    %v48 = vmax.f32 %v47, 1e-30
    %v49 = vrsqrt.pop %v48
    %v50 = vmul.f32 %v48, %v49
    %vm51 = vcmp.eq.f32.partialorder %v48, inf
    %v52 = vsel %vm51, %v48, %v50
    %vm53 = vcmp.eq.f32.partialorder %v48, 0.0
    %v54 = vand.u32 %v48, 2147483648
    %v55 = vsel %vm53, %v54, %v52
    %v56 = vrcp.pop %v55
    %v57 = vmul.f32 1.0, %v56
    %v58 = vmul.f32 %v43, %v57
    %v59 = vld [vmem:[#allocation5] sm:$0xff]
    %v60 = vsel %vm37, %v59, 0.0
    %61 = vadd.xlane.f32.xlu0 %v60
    %v62 = vpop.xlane.xlu0 %61
    %v63 = vmul.f32 %v62, %v41
    %v64 = vsub.f32 %v59, %v63
    %v65 = vmul.f32 %v64, %v64
    %v66 = vsel %vm37, %v65, 0.0
    %67 = vadd.xlane.f32.xlu0 %v66
    %v68 = vpop.xlane.xlu0 %67
    %v69 = vmax.f32 %v68, 1e-30
    %v70 = vrsqrt.pop %v69
    %v71 = vmul.f32 %v69, %v70
    %vm72 = vcmp.eq.f32.partialorder %v69, inf
    %v73 = vsel %vm72, %v69, %v71
    %vm74 = vcmp.eq.f32.partialorder %v69, 0.0
    %v75 = vand.u32 %v69, 2147483648
    %v76 = vsel %vm74, %v75, %v73
    %v77 = vrcp.pop %v76
    %v78 = vmul.f32 1.0, %v77
    %v79 = vmul.f32 %v64, %v78
    %v81 = vsel %vm37, %v58, 0
    %v84 = vsel %vm37, %v79, 0
    %86 = vmatprep.subr.mxu0 0.0
    %87 = vmatpush1.xpose.msra.mxu0 0.0
    %88 = vmatprep.subr.mxu0 0.0
    %89 = vmatpush1.xpose.msra.mxu0 0.0
    %90 = vmatprep.subr.mxu0 0.0
    %91 = vmatpush1.xpose.msra.mxu0 0.0
    %92 = vmatprep.subr.mxu0 0.0
    %93 = vmatpush1.xpose.msra.mxu0 0.0
    %94 = vmatprep.subr.mxu0 0.0
    %95 = vmatpush1.xpose.msra.mxu0 0.0
    %96 = vmatprep.subr.mxu0 0.0
    %97 = vmatpush1.xpose.msra.mxu0 0.0
    %98 = vmatprep.subr.mxu0 0.0
    %99 = vmatpush1.xpose.msra.mxu0 0.0
    %100 = vmatprep.subr.mxu0 0.0
    %101 = vmatpush1.xpose.msra.mxu0 0.0
    %102 = vmatprep.subr.mxu0 0.0
    %103 = vmatpush1.xpose.msra.mxu0 0.0
    %104 = vmatprep.subr.mxu0 0.0
    %105 = vmatpush1.xpose.msra.mxu0 0.0
    %106 = vmatprep.subr.mxu0 0.0
    %107 = vmatpush1.xpose.msra.mxu0 0.0
    %108 = vmatprep.subr.mxu0 0.0
    %109 = vmatpush1.xpose.msra.mxu0 0.0
    %110 = vmatprep.subr.mxu0 0.0
    %111 = vmatpush1.xpose.msra.mxu0 0.0
    %112 = vmatprep.subr.mxu0 0.0
    %113 = vmatpush1.xpose.msra.mxu0 0.0
    %114 = vmatprep.subr.mxu0 0.0
    %115 = vmatpush1.xpose.msra.mxu0 0.0
    %116 = vmatprep.subr.mxu0 0.0
    %117 = vmatpush1.xpose.msra.mxu0 %v84
    %118 = vmatprep.subr.mxu0 0.0
    %119 = vmatpush2.xpose.msra.mxu0 0.0
    %120 = vmatprep.subr.mxu0 0.0
    %121 = vmatpush2.xpose.msra.mxu0 0.0
    %122 = vmatprep.subr.mxu0 0.0
    %123 = vmatpush2.xpose.msra.mxu0 0.0
    %124 = vmatprep.subr.mxu0 0.0
    %125 = vmatpush2.xpose.msra.mxu0 0.0
    %126 = vmatprep.subr.mxu0 0.0
    %127 = vmatpush2.xpose.msra.mxu0 0.0
    %128 = vmatprep.subr.mxu0 0.0
    %129 = vmatpush2.xpose.msra.mxu0 0.0
    %130 = vmatprep.subr.mxu0 0.0
    %131 = vmatpush2.xpose.msra.mxu0 0.0
    %132 = vmatprep.subr.mxu0 0.0
    %133 = vmatpush2.xpose.msra.mxu0 0.0
    %134 = vmatprep.subr.mxu0 0.0
    %135 = vmatpush2.xpose.msra.mxu0 0.0
    %136 = vmatprep.subr.mxu0 0.0
    %137 = vmatpush2.xpose.msra.mxu0 0.0
    %138 = vmatprep.subr.mxu0 0.0
    %139 = vmatpush2.xpose.msra.mxu0 0.0
    %140 = vmatprep.subr.mxu0 0.0
    %141 = vmatpush2.xpose.msra.mxu0 0.0
    %142 = vmatprep.subr.mxu0 0.0
    %143 = vmatpush2.xpose.msra.mxu0 0.0
    %144 = vmatprep.subr.mxu0 0.0
    %145 = vmatpush2.xpose.msra.mxu0 0.0
    %146 = vmatprep.subr.mxu0 0.0
    %147 = vmatpush2.xpose.msra.mxu0 0.0
    %148 = vmatprep.subr.mxu0 0.0
    %149 = vmatpush2.xpose.msra.mxu0 0.0
    %150 = vmatprep.mubr.f32.mxu0 0.0
    %151 = vmatmul.mubr.f32.gmra.mxu0 %v81
    %v152 = vpop.f32.mrf.mxu0
    %v153 = vadd.f32 0.0, %v152
    %v154 = vpop.f32.mrf.mxu0
    %155 = vdwg.mxu0
    %v156 = vmax.f32 %v153, 0.0
    %vm157 = vcmask 64512
    %158 = vst.msk [vmem:[#allocation7] sm:$0xff] %vm157, %v156
    // Predicated region
    $region18: #{tpu_custom_call.1} parent=1 // pred_check
      _
    $region19: #{tpu_custom_call.1} parent=1 // pred_check_branch
      %160 = sbr.rel (0) target = $region21
    $region20: #{tpu_custom_call.1} parent=1 // pred_region
      %s162 = ssub.s32 128, 128
      %163 = vsyncadd [#allocation4], %s162
      %s165 = sshll.u32 [#allocation7], 4
      %s166 = int_to_ptr.vmem [resolvable:$true] %s165
      %168 = dma.vmem_to_hbm [thread:$0]  %s166, 128, %s2, [#allocation4]
    $region21: #{tpu_custom_call.1} parent=1 // pred_fallthru
      _
    // Predicated region
    $region22: #{tpu_custom_call.1} parent=1 // pred_check
      _
    $region23: #{tpu_custom_call.1} parent=1 // pred_check_branch
      %170 = sbr.rel (0) target = $region25
    $region24: #{tpu_custom_call.1} parent=1 // pred_region
      %171 = dma.done [#allocation4], 128
    $region25: #{tpu_custom_call.1} parent=1 // pred_fallthru
      _
    %172 = vsyncpa [#allocation3], 1
    %173 = vsyncpa [#allocation6], 1
    %174 = vsyncpa [#allocation4], 1

</llo_original>
